<compile_context>
chip_gen: v5e
topology: v5e:2x2
jax: 0.10.0
libtpu: 0.0.40
codegen_flags: <defaults>
</compile_context>

<pallas_src>
import jax
import jax.numpy as jnp
from jax.experimental import pallas as pl
from jax.experimental.pallas import tpu as pltpu

B = 2          # batch
L = 24         # sequence length; Linear(4*64, 3) forces the conv chain to T=4

W   = L - 4    # 20  width of x20 row 0
W1  = W - 2    # 18  cnn21 output width
W1P = 24       # W1 zero-padded to a multiple of 8 -> tile-exact 2D<->3D reshapes
W2  = W1 - 2   # 16  cnn22 output width
T   = W2 - 12  # 4   cnn23 output length (k=7, dilation=2)

# Row offsets inside the packed bf16 weight slab.  Every block start is a
# multiple of 16 so all in-kernel slices stay bf16-sublane-tile aligned.
OFF_W21 = 0                 # (4, 16)   rows 0..2: cnn21 ki=0 taps (kj, o); row 3: b21
OFF_W22 = 16                # (48, 32)  row kj*16 + c -> col o   (cnn22 ki=0)
OFF_W23 = 64                # (224, 64) row k*32  + c -> col o
OFF_WL  = 288               # (256, 3)  row t*64  + c -> col n   (torch flat = c*4+t)
WPACK_ROWS = OFF_WL + 256   # 544


# ---------------------------------------------------------------------------
# Pallas kernel: Conv2d(1,16,3)+ReLU -> Conv2d(16,32,3)+ReLU
#                -> Conv1d(32,64,7,dilation=2)+ReLU -> Linear(256,3)
# ---------------------------------------------------------------------------
def rnn_kernel(p21_ref, w_ref, bias_ref, out_ref):
    Bn = out_ref.shape[0]

    # ---- cnn21: one (B*W1P, 4) x (4, 16) MXU dot.  Column 3 of p21 is all
    # ones and row 3 of the weight block is b21, so the bias is folded in.
    y21 = jnp.dot(p21_ref[...], w_ref[OFF_W21:OFF_W21 + 4, 0:16],
                  preferred_element_type=jnp.float32)
    y21 = jnp.maximum(y21, 0.0).reshape(Bn, W1P, 16)     # tile-exact (W1P % 8 == 0)

    # ---- cnn22 (ki=0 only; ki=1,2 live in b22_eff): 3 accumulating
    # (B*W2, 16) x (16, 32) dots; activation slices cost only sublane shifts.
    def tap22(kj):
        lhs = y21[:, kj:kj + W2, :].reshape(Bn * W2, 16).astype(jnp.bfloat16)
        rhs = w_ref[OFF_W22 + 16 * kj:OFF_W22 + 16 * kj + 16, 0:32]
        return jnp.dot(lhs, rhs, preferred_element_type=jnp.float32)

    acc22 = tap22(0) + tap22(1) + tap22(2)
    y22 = jnp.maximum(acc22 + bias_ref[0:1, 0:32], 0.0)  # (B*W2, 32) f32
    y22 = y22.reshape(Bn, W2, 32)                        # tile-exact (W2 % 8 == 0)

    # ---- cnn23 (k=7, dilation=2): 7 accumulating (B,T,32) x (32,64)
    # contractions -- no K=224 lane concat.
    def tap23(k):
        lhs = y22[:, 2 * k:2 * k + T, :].astype(jnp.bfloat16)
        rhs = w_ref[OFF_W23 + 32 * k:OFF_W23 + 32 * k + 32, 0:64]
        return jnp.einsum('btk,ko->bto', lhs, rhs,
                          preferred_element_type=jnp.float32)

    acc23 = tap23(0)
    for k in range(1, 7):
        acc23 = acc23 + tap23(k)
    y23 = jnp.maximum(acc23 + bias_ref[1:2, 0:64], 0.0)  # (B, T, 64) f32

    # ---- line2: torch's channel-major flatten (c*4+t) is encoded in the
    # t-major row packing of the slab; 4 accumulating (B,64)x(64,3) dots
    # instead of a 256-wide lane concat.
    def tapl(t):
        lhs = y23[:, t, :].astype(jnp.bfloat16)
        rhs = w_ref[OFF_WL + 64 * t:OFF_WL + 64 * t + 64, 0:3]
        return jnp.dot(lhs, rhs, preferred_element_type=jnp.float32)

    out = tapl(0) + tapl(1) + tapl(2) + tapl(3)
    out_ref[...] = out + bias_ref[2:3, 0:3]


# ---------------------------------------------------------------------------
# Parameters (deterministic, PyTorch-style uniform(-1/sqrt(fan_in), +1/sqrt(fan_in)))
# cnn1..cnn4 and line1 never influence the outputs (shapes only), so they are
# not materialized.
# ---------------------------------------------------------------------------
def init_params(key):
    ks = jax.random.split(key, 8)

    def u(k, shape, fan_in):
        bound = 1.0 / jnp.sqrt(jnp.float32(fan_in))
        return jax.random.uniform(k, shape, jnp.float32, -bound, bound)

    return {
        'w21': u(ks[0], (16, 1, 3, 3), 1 * 3 * 3),
        'b21': u(ks[1], (16,),         1 * 3 * 3),
        'w22': u(ks[2], (32, 16, 3, 3), 16 * 3 * 3),
        'b22': u(ks[3], (32,),          16 * 3 * 3),
        'w23': u(ks[4], (64, 32, 7),    32 * 7),
        'b23': u(ks[5], (64,),          32 * 7),
        'wl':  u(ks[6], (3, 256),       256),
        'bl':  u(ks[7], (3,),           256),
    }


# ---------------------------------------------------------------------------
# One-time weight packing (hoisted out of the per-call forward path).
# ---------------------------------------------------------------------------
def pack_params(p):
    """Runs ONCE at init: all transposes / reshapes / bf16 casts / bias folds
    happen here so the per-call forward is just slice-x + pallas_call."""
    r21 = jax.nn.relu(p['b21'])                                        # (16,)
    # Effective cnn22 bias: b22 + contribution of the constant y21 rows 1,2
    # (valid only because rows 1..4 of x20 are structurally zero).
    b22_eff = p['b22'] + p['w22'][:, :, 1:, :].sum(axis=(2, 3)) @ r21  # (32,)

    # cnn21 kernel row ki=0 as (kj, o), with b21 appended as row 3.
    w21p = jnp.concatenate(
        [jnp.transpose(p['w21'][:, 0, 0, :], (1, 0)), p['b21'][None, :]], axis=0)
    # cnn22 kernel row ki=0 as im2col weight: row kj*16 + c, col o.
    w22r = jnp.transpose(p['w22'][:, :, 0, :], (2, 1, 0)).reshape(48, 32)
    # cnn23 im2col weight: row k*32 + c, col o.
    w23r = jnp.transpose(p['w23'], (2, 1, 0)).reshape(224, 64)
    # line2: torch flat index is c*4 + t -> reorder rows to t*64 + c.
    wlr = jnp.transpose(p['wl'].reshape(3, 64, 4), (2, 1, 0)).reshape(256, 3)

    w = jnp.zeros((WPACK_ROWS, 64), jnp.float32)
    w = w.at[OFF_W21:OFF_W21 + 4, 0:16].set(w21p)
    w = w.at[OFF_W22:OFF_W22 + 48, 0:32].set(w22r)
    w = w.at[OFF_W23:OFF_W23 + 224, 0:64].set(w23r)
    w = w.at[OFF_WL:OFF_WL + 256, 0:3].set(wlr)

    bias = jnp.zeros((3, 64), jnp.float32)
    bias = bias.at[0, 0:32].set(b22_eff)
    bias = bias.at[1, 0:64].set(p['b23'])
    bias = bias.at[2, 0:3].set(p['bl'])

    return {'w': w.astype(jnp.bfloat16), 'bias': bias}


# ---------------------------------------------------------------------------
# Per-call wrapper: zeros for out1, tiny x im2col, one pallas_call.
# ---------------------------------------------------------------------------
def rnn_forward(x, packed):
    Bx, _, Lx = x.shape
    Wd = Lx - 4
    assert Wd == W, "Linear(4*64, 3) pins the conv chain to L == 24"

    # out1 = cat of four zero tensors -> structurally zero.  The ki=0-only /
    # b22_eff folding baked into the kernel / pack_params RELIES on this; if
    # out1 ever becomes non-zero the folding must be removed.
    out1 = jnp.zeros((Bx, 4, Wd), jnp.float32)

    # Pre-im2col the single live row of x20 for cnn21: width-3 taps plus a
    # ones column (folds b21 into the weight slab); W zero-padded to W1P so
    # the kernel's 2D<->3D reshapes are sublane-tile exact.  Fuses with the x
    # slice into one tiny per-call XLA fusion; padded rows >= W1 are never
    # read downstream (cnn22 only touches rows kj..kj+W2-1 <= 17).
    xrow = x[:, 0, 4:]                                              # (B, W)
    xpad = jnp.pad(xrow, ((0, 0), (0, W1P + 2 - Wd)))               # (B, W1P+2)
    taps = [xpad[:, k:k + W1P] for k in range(3)]
    p21 = jnp.stack(taps + [jnp.ones_like(taps[0])], axis=-1)       # (B, W1P, 4)
    p21 = p21.reshape(Bx * W1P, 4).astype(jnp.bfloat16)

    vmem = pl.BlockSpec(memory_space=pltpu.MemorySpace.VMEM)
    out2 = pl.pallas_call(
        rnn_kernel,
        out_shape=jax.ShapeDtypeStruct((Bx, 3), jnp.float32),
        in_specs=[vmem, vmem, vmem],
        out_specs=vmem,
    )(p21, packed['w'], packed['bias'])
    return out1, out2


# ---------------------------------------------------------------------------
# Pure-JAX f32 reference (lax convs) for the correctness check.
# ---------------------------------------------------------------------------
def ref_forward(x, p):
    Bx = x.shape[0]
    xt = x[:, :, 4:]
    out1 = jnp.zeros((Bx, 4, xt.shape[-1]), jnp.float32)
    x20 = jnp.concatenate([xt, out1], axis=1)[:, None, :, :]          # (B,1,5,W)

    y21 = jax.lax.conv_general_dilated(x20, p['w21'], (1, 1), 'VALID',
                                       dimension_numbers=('NCHW', 'OIHW', 'NCHW'))
    y21 = jax.nn.relu(y21 + p['b21'][None, :, None, None])
    y22 = jax.lax.conv_general_dilated(y21, p['w22'], (1, 1), 'VALID',
                                       dimension_numbers=('NCHW', 'OIHW', 'NCHW'))
    y22 = jax.nn.relu(y22 + p['b22'][None, :, None, None])
    y22s = y22[:, :, 0, :]                                            # (B,32,W2)
    y23 = jax.lax.conv_general_dilated(y22s, p['w23'], (1,), 'VALID',
                                       rhs_dilation=(2,),
                                       dimension_numbers=('NCH', 'OIH', 'NCH'))
    y23 = jax.nn.relu(y23 + p['b23'][None, :, None])
    out2 = y23.reshape(Bx, -1) @ p['wl'].T + p['bl']
    return out1, out2


if __name__ == "__main__":
    key = jax.random.PRNGKey(0)
    k_x, k_p = jax.random.split(key)
    x = jax.random.normal(k_x, (B, 1, L), jnp.float32)
    params = init_params(k_p)

    packed = pack_params(params)          # one-time weight prep (not per call)

    fwd = jax.jit(rnn_forward)
    out1, out2 = fwd(x, packed)
    jax.block_until_ready((out1, out2))

    ref1, ref2 = ref_forward(x, params)
    assert out1.shape == (B, 4, L - 4) and out2.shape == (B, 3)
    assert jnp.allclose(out1, ref1, atol=1e-6)
    # bf16 MXU operands (f32 accumulation) vs f32 reference -> loosened tolerance
    assert jnp.allclose(out2, ref2, atol=2e-2, rtol=2e-2)

    print("KERNEL_OK")
</pallas_src>

<mosaic_0001>
module attributes {stable_mosaic.version = 11 : i64} {
  func.func @rnn_kernel(%arg0: memref<48x4xbf16, #tpu.memory_space<vmem>>, %arg1: memref<544x64xbf16, #tpu.memory_space<vmem>>, %arg2: memref<3x64xf32, #tpu.memory_space<vmem>>, %arg3: memref<2x3xf32, #tpu.memory_space<vmem>>) attributes {dimension_semantics = [], scalar_prefetch = 0 : i64, scratch_operands = 0 : i64, tpu.core_type = #tpu.core_type<tc>} {
    %c0 = arith.constant 0 : index
    %c0_0 = arith.constant 0 : index
    %0 = vector.load %arg0[%c0, %c0_0] : memref<48x4xbf16, #tpu.memory_space<vmem>>, vector<48x4xbf16>
    %c0_1 = arith.constant 0 : index
    %c0_2 = arith.constant 0 : index
    %1 = vector.load %arg1[%c0_1, %c0_2] : memref<544x64xbf16, #tpu.memory_space<vmem>>, vector<4x16xbf16>
    %cst = arith.constant dense<0.000000e+00> : vector<48x16xf32>
    %2 = tpu.matmul %0, %1, %cst {dimension_numbers = #tpu.dot_dimension_numbers<[1], [0], [0], [1], [0, 0, 1, 1], [], []>} : vector<48x4xbf16>, vector<4x16xbf16>, vector<48x16xf32> -> vector<48x16xf32>
    %cst_3 = arith.constant 0.000000e+00 : f32
    %3 = vector.broadcast %cst_3 : f32 to vector<48x16xf32>
    %4 = arith.maximumf %2, %3 : vector<48x16xf32>
    %5 = vector.shape_cast %4 : vector<48x16xf32> to vector<2x24x16xf32>
    %6 = vector.extract_strided_slice %5 {offsets = [0, 0, 0], sizes = [2, 16, 16], strides = [1, 1, 1]} : vector<2x24x16xf32> to vector<2x16x16xf32>
    %7 = vector.shape_cast %6 : vector<2x16x16xf32> to vector<32x16xf32>
    %8 = arith.truncf %7 : vector<32x16xf32> to vector<32x16xbf16>
    %c16 = arith.constant 16 : index
    %c0_4 = arith.constant 0 : index
    %9 = vector.load %arg1[%c16, %c0_4] : memref<544x64xbf16, #tpu.memory_space<vmem>>, vector<16x32xbf16>
    %cst_5 = arith.constant dense<0.000000e+00> : vector<32x32xf32>
    %10 = tpu.matmul %8, %9, %cst_5 {dimension_numbers = #tpu.dot_dimension_numbers<[1], [0], [0], [1], [0, 0, 1, 1], [], []>} : vector<32x16xbf16>, vector<16x32xbf16>, vector<32x32xf32> -> vector<32x32xf32>
    %11 = vector.extract_strided_slice %5 {offsets = [0, 1, 0], sizes = [2, 16, 16], strides = [1, 1, 1]} : vector<2x24x16xf32> to vector<2x16x16xf32>
    %12 = vector.shape_cast %11 : vector<2x16x16xf32> to vector<32x16xf32>
    %13 = arith.truncf %12 : vector<32x16xf32> to vector<32x16xbf16>
    %c32 = arith.constant 32 : index
    %c0_6 = arith.constant 0 : index
    %14 = vector.load %arg1[%c32, %c0_6] : memref<544x64xbf16, #tpu.memory_space<vmem>>, vector<16x32xbf16>
    %cst_7 = arith.constant dense<0.000000e+00> : vector<32x32xf32>
    %15 = tpu.matmul %13, %14, %cst_7 {dimension_numbers = #tpu.dot_dimension_numbers<[1], [0], [0], [1], [0, 0, 1, 1], [], []>} : vector<32x16xbf16>, vector<16x32xbf16>, vector<32x32xf32> -> vector<32x32xf32>
    %16 = arith.addf %10, %15 : vector<32x32xf32>
    %17 = vector.extract_strided_slice %5 {offsets = [0, 2, 0], sizes = [2, 16, 16], strides = [1, 1, 1]} : vector<2x24x16xf32> to vector<2x16x16xf32>
    %18 = vector.shape_cast %17 : vector<2x16x16xf32> to vector<32x16xf32>
    %19 = arith.truncf %18 : vector<32x16xf32> to vector<32x16xbf16>
    %c48 = arith.constant 48 : index
    %c0_8 = arith.constant 0 : index
    %20 = vector.load %arg1[%c48, %c0_8] : memref<544x64xbf16, #tpu.memory_space<vmem>>, vector<16x32xbf16>
    %cst_9 = arith.constant dense<0.000000e+00> : vector<32x32xf32>
    %21 = tpu.matmul %19, %20, %cst_9 {dimension_numbers = #tpu.dot_dimension_numbers<[1], [0], [0], [1], [0, 0, 1, 1], [], []>} : vector<32x16xbf16>, vector<16x32xbf16>, vector<32x32xf32> -> vector<32x32xf32>
    %22 = arith.addf %16, %21 : vector<32x32xf32>
    %c0_10 = arith.constant 0 : index
    %c0_11 = arith.constant 0 : index
    %23 = vector.load %arg2[%c0_10, %c0_11] : memref<3x64xf32, #tpu.memory_space<vmem>>, vector<1x32xf32>
    %24 = vector.broadcast %23 : vector<1x32xf32> to vector<32x32xf32>
    %25 = arith.addf %22, %24 : vector<32x32xf32>
    %cst_12 = arith.constant 0.000000e+00 : f32
    %26 = vector.broadcast %cst_12 : f32 to vector<32x32xf32>
    %27 = arith.maximumf %25, %26 : vector<32x32xf32>
    %28 = vector.shape_cast %27 : vector<32x32xf32> to vector<2x16x32xf32>
    %29 = vector.extract_strided_slice %28 {offsets = [0, 0, 0], sizes = [2, 4, 32], strides = [1, 1, 1]} : vector<2x16x32xf32> to vector<2x4x32xf32>
    %30 = arith.truncf %29 : vector<2x4x32xf32> to vector<2x4x32xbf16>
    %c64 = arith.constant 64 : index
    %c0_13 = arith.constant 0 : index
    %31 = vector.load %arg1[%c64, %c0_13] : memref<544x64xbf16, #tpu.memory_space<vmem>>, vector<32x64xbf16>
    "tpu.trace_start"() <{level = 10 : i32, message = "btk,ko->bto"}> : () -> ()
    %cst_14 = arith.constant dense<0.000000e+00> : vector<2x4x64xf32>
    %32 = tpu.matmul %30, %31, %cst_14 {dimension_numbers = #tpu.dot_dimension_numbers<[2], [0], [0, 1], [1], [0, 0, 0, 1, 1, 1], [], []>} : vector<2x4x32xbf16>, vector<32x64xbf16>, vector<2x4x64xf32> -> vector<2x4x64xf32>
    "tpu.trace_stop"() : () -> ()
    %33 = vector.extract_strided_slice %28 {offsets = [0, 2, 0], sizes = [2, 4, 32], strides = [1, 1, 1]} : vector<2x16x32xf32> to vector<2x4x32xf32>
    %34 = arith.truncf %33 : vector<2x4x32xf32> to vector<2x4x32xbf16>
    %c96 = arith.constant 96 : index
    %c0_15 = arith.constant 0 : index
    %35 = vector.load %arg1[%c96, %c0_15] : memref<544x64xbf16, #tpu.memory_space<vmem>>, vector<32x64xbf16>
    "tpu.trace_start"() <{level = 10 : i32, message = "btk,ko->bto"}> : () -> ()
    %cst_16 = arith.constant dense<0.000000e+00> : vector<2x4x64xf32>
    %36 = tpu.matmul %34, %35, %cst_16 {dimension_numbers = #tpu.dot_dimension_numbers<[2], [0], [0, 1], [1], [0, 0, 0, 1, 1, 1], [], []>} : vector<2x4x32xbf16>, vector<32x64xbf16>, vector<2x4x64xf32> -> vector<2x4x64xf32>
    "tpu.trace_stop"() : () -> ()
    %37 = arith.addf %32, %36 : vector<2x4x64xf32>
    %38 = vector.extract_strided_slice %28 {offsets = [0, 4, 0], sizes = [2, 4, 32], strides = [1, 1, 1]} : vector<2x16x32xf32> to vector<2x4x32xf32>
    %39 = arith.truncf %38 : vector<2x4x32xf32> to vector<2x4x32xbf16>
    %c128 = arith.constant 128 : index
    %c0_17 = arith.constant 0 : index
    %40 = vector.load %arg1[%c128, %c0_17] : memref<544x64xbf16, #tpu.memory_space<vmem>>, vector<32x64xbf16>
    "tpu.trace_start"() <{level = 10 : i32, message = "btk,ko->bto"}> : () -> ()
    %cst_18 = arith.constant dense<0.000000e+00> : vector<2x4x64xf32>
    %41 = tpu.matmul %39, %40, %cst_18 {dimension_numbers = #tpu.dot_dimension_numbers<[2], [0], [0, 1], [1], [0, 0, 0, 1, 1, 1], [], []>} : vector<2x4x32xbf16>, vector<32x64xbf16>, vector<2x4x64xf32> -> vector<2x4x64xf32>
    "tpu.trace_stop"() : () -> ()
    %42 = arith.addf %37, %41 : vector<2x4x64xf32>
    %43 = vector.extract_strided_slice %28 {offsets = [0, 6, 0], sizes = [2, 4, 32], strides = [1, 1, 1]} : vector<2x16x32xf32> to vector<2x4x32xf32>
    %44 = arith.truncf %43 : vector<2x4x32xf32> to vector<2x4x32xbf16>
    %c160 = arith.constant 160 : index
    %c0_19 = arith.constant 0 : index
    %45 = vector.load %arg1[%c160, %c0_19] : memref<544x64xbf16, #tpu.memory_space<vmem>>, vector<32x64xbf16>
    "tpu.trace_start"() <{level = 10 : i32, message = "btk,ko->bto"}> : () -> ()
    %cst_20 = arith.constant dense<0.000000e+00> : vector<2x4x64xf32>
    %46 = tpu.matmul %44, %45, %cst_20 {dimension_numbers = #tpu.dot_dimension_numbers<[2], [0], [0, 1], [1], [0, 0, 0, 1, 1, 1], [], []>} : vector<2x4x32xbf16>, vector<32x64xbf16>, vector<2x4x64xf32> -> vector<2x4x64xf32>
    "tpu.trace_stop"() : () -> ()
    %47 = arith.addf %42, %46 : vector<2x4x64xf32>
    %48 = vector.extract_strided_slice %28 {offsets = [0, 8, 0], sizes = [2, 4, 32], strides = [1, 1, 1]} : vector<2x16x32xf32> to vector<2x4x32xf32>
    %49 = arith.truncf %48 : vector<2x4x32xf32> to vector<2x4x32xbf16>
    %c192 = arith.constant 192 : index
    %c0_21 = arith.constant 0 : index
    %50 = vector.load %arg1[%c192, %c0_21] : memref<544x64xbf16, #tpu.memory_space<vmem>>, vector<32x64xbf16>
    "tpu.trace_start"() <{level = 10 : i32, message = "btk,ko->bto"}> : () -> ()
    %cst_22 = arith.constant dense<0.000000e+00> : vector<2x4x64xf32>
    %51 = tpu.matmul %49, %50, %cst_22 {dimension_numbers = #tpu.dot_dimension_numbers<[2], [0], [0, 1], [1], [0, 0, 0, 1, 1, 1], [], []>} : vector<2x4x32xbf16>, vector<32x64xbf16>, vector<2x4x64xf32> -> vector<2x4x64xf32>
    "tpu.trace_stop"() : () -> ()
    %52 = arith.addf %47, %51 : vector<2x4x64xf32>
    %53 = vector.extract_strided_slice %28 {offsets = [0, 10, 0], sizes = [2, 4, 32], strides = [1, 1, 1]} : vector<2x16x32xf32> to vector<2x4x32xf32>
    %54 = arith.truncf %53 : vector<2x4x32xf32> to vector<2x4x32xbf16>
    %c224 = arith.constant 224 : index
    %c0_23 = arith.constant 0 : index
    %55 = vector.load %arg1[%c224, %c0_23] : memref<544x64xbf16, #tpu.memory_space<vmem>>, vector<32x64xbf16>
    "tpu.trace_start"() <{level = 10 : i32, message = "btk,ko->bto"}> : () -> ()
    %cst_24 = arith.constant dense<0.000000e+00> : vector<2x4x64xf32>
    %56 = tpu.matmul %54, %55, %cst_24 {dimension_numbers = #tpu.dot_dimension_numbers<[2], [0], [0, 1], [1], [0, 0, 0, 1, 1, 1], [], []>} : vector<2x4x32xbf16>, vector<32x64xbf16>, vector<2x4x64xf32> -> vector<2x4x64xf32>
    "tpu.trace_stop"() : () -> ()
    %57 = arith.addf %52, %56 : vector<2x4x64xf32>
    %58 = vector.extract_strided_slice %28 {offsets = [0, 12, 0], sizes = [2, 4, 32], strides = [1, 1, 1]} : vector<2x16x32xf32> to vector<2x4x32xf32>
    %59 = arith.truncf %58 : vector<2x4x32xf32> to vector<2x4x32xbf16>
    %c256 = arith.constant 256 : index
    %c0_25 = arith.constant 0 : index
    %60 = vector.load %arg1[%c256, %c0_25] : memref<544x64xbf16, #tpu.memory_space<vmem>>, vector<32x64xbf16>
    "tpu.trace_start"() <{level = 10 : i32, message = "btk,ko->bto"}> : () -> ()
    %cst_26 = arith.constant dense<0.000000e+00> : vector<2x4x64xf32>
    %61 = tpu.matmul %59, %60, %cst_26 {dimension_numbers = #tpu.dot_dimension_numbers<[2], [0], [0, 1], [1], [0, 0, 0, 1, 1, 1], [], []>} : vector<2x4x32xbf16>, vector<32x64xbf16>, vector<2x4x64xf32> -> vector<2x4x64xf32>
    "tpu.trace_stop"() : () -> ()
    %62 = arith.addf %57, %61 : vector<2x4x64xf32>
    %c1 = arith.constant 1 : index
    %c0_27 = arith.constant 0 : index
    %63 = vector.load %arg2[%c1, %c0_27] : memref<3x64xf32, #tpu.memory_space<vmem>>, vector<1x64xf32>
    %64 = vector.shape_cast %63 : vector<1x64xf32> to vector<1x1x64xf32>
    %65 = vector.broadcast %64 : vector<1x1x64xf32> to vector<2x4x64xf32>
    %66 = arith.addf %62, %65 : vector<2x4x64xf32>
    %cst_28 = arith.constant 0.000000e+00 : f32
    %67 = vector.broadcast %cst_28 : f32 to vector<2x4x64xf32>
    %68 = arith.maximumf %66, %67 : vector<2x4x64xf32>
    %69 = vector.extract_strided_slice %68 {offsets = [0, 0, 0], sizes = [2, 1, 64], strides = [1, 1, 1]} : vector<2x4x64xf32> to vector<2x1x64xf32>
    %70 = vector.shape_cast %69 : vector<2x1x64xf32> to vector<2x64xf32>
    %71 = arith.truncf %70 : vector<2x64xf32> to vector<2x64xbf16>
    %c288 = arith.constant 288 : index
    %c0_29 = arith.constant 0 : index
    %72 = vector.load %arg1[%c288, %c0_29] : memref<544x64xbf16, #tpu.memory_space<vmem>>, vector<64x3xbf16>
    %cst_30 = arith.constant dense<0.000000e+00> : vector<2x3xf32>
    %73 = tpu.matmul %71, %72, %cst_30 {dimension_numbers = #tpu.dot_dimension_numbers<[1], [0], [0], [1], [0, 0, 1, 1], [], []>} : vector<2x64xbf16>, vector<64x3xbf16>, vector<2x3xf32> -> vector<2x3xf32>
    %74 = vector.extract_strided_slice %68 {offsets = [0, 1, 0], sizes = [2, 1, 64], strides = [1, 1, 1]} : vector<2x4x64xf32> to vector<2x1x64xf32>
    %75 = vector.shape_cast %74 : vector<2x1x64xf32> to vector<2x64xf32>
    %76 = arith.truncf %75 : vector<2x64xf32> to vector<2x64xbf16>
    %c352 = arith.constant 352 : index
    %c0_31 = arith.constant 0 : index
    %77 = vector.load %arg1[%c352, %c0_31] : memref<544x64xbf16, #tpu.memory_space<vmem>>, vector<64x3xbf16>
    %cst_32 = arith.constant dense<0.000000e+00> : vector<2x3xf32>
    %78 = tpu.matmul %76, %77, %cst_32 {dimension_numbers = #tpu.dot_dimension_numbers<[1], [0], [0], [1], [0, 0, 1, 1], [], []>} : vector<2x64xbf16>, vector<64x3xbf16>, vector<2x3xf32> -> vector<2x3xf32>
    %79 = arith.addf %73, %78 : vector<2x3xf32>
    %80 = vector.extract_strided_slice %68 {offsets = [0, 2, 0], sizes = [2, 1, 64], strides = [1, 1, 1]} : vector<2x4x64xf32> to vector<2x1x64xf32>
    %81 = vector.shape_cast %80 : vector<2x1x64xf32> to vector<2x64xf32>
    %82 = arith.truncf %81 : vector<2x64xf32> to vector<2x64xbf16>
    %c416 = arith.constant 416 : index
    %c0_33 = arith.constant 0 : index
    %83 = vector.load %arg1[%c416, %c0_33] : memref<544x64xbf16, #tpu.memory_space<vmem>>, vector<64x3xbf16>
    %cst_34 = arith.constant dense<0.000000e+00> : vector<2x3xf32>
    %84 = tpu.matmul %82, %83, %cst_34 {dimension_numbers = #tpu.dot_dimension_numbers<[1], [0], [0], [1], [0, 0, 1, 1], [], []>} : vector<2x64xbf16>, vector<64x3xbf16>, vector<2x3xf32> -> vector<2x3xf32>
    %85 = arith.addf %79, %84 : vector<2x3xf32>
    %86 = vector.extract_strided_slice %68 {offsets = [0, 3, 0], sizes = [2, 1, 64], strides = [1, 1, 1]} : vector<2x4x64xf32> to vector<2x1x64xf32>
    %87 = vector.shape_cast %86 : vector<2x1x64xf32> to vector<2x64xf32>
    %88 = arith.truncf %87 : vector<2x64xf32> to vector<2x64xbf16>
    %c480 = arith.constant 480 : index
    %c0_35 = arith.constant 0 : index
    %89 = vector.load %arg1[%c480, %c0_35] : memref<544x64xbf16, #tpu.memory_space<vmem>>, vector<64x3xbf16>
    %cst_36 = arith.constant dense<0.000000e+00> : vector<2x3xf32>
    %90 = tpu.matmul %88, %89, %cst_36 {dimension_numbers = #tpu.dot_dimension_numbers<[1], [0], [0], [1], [0, 0, 1, 1], [], []>} : vector<2x64xbf16>, vector<64x3xbf16>, vector<2x3xf32> -> vector<2x3xf32>
    %91 = arith.addf %85, %90 : vector<2x3xf32>
    %c2 = arith.constant 2 : index
    %c0_37 = arith.constant 0 : index
    %92 = vector.load %arg2[%c2, %c0_37] : memref<3x64xf32, #tpu.memory_space<vmem>>, vector<1x3xf32>
    %93 = vector.broadcast %92 : vector<1x3xf32> to vector<2x3xf32>
    %94 = arith.addf %91, %93 : vector<2x3xf32>
    %c0_38 = arith.constant 0 : index
    %c0_39 = arith.constant 0 : index
    %95 = vector.load %arg3[%c0_38, %c0_39] : memref<2x3xf32, #tpu.memory_space<vmem>>, vector<2x3xf32>
    tpu.vector_store %arg3[%c0_38, %c0_39], %94 {strides = array<i32>} : memref<2x3xf32, #tpu.memory_space<vmem>>, vector<2x3xf32>,
    return
  }
}

</mosaic_0001>

<llo_original>
// kernel: rnn_forward.1
$region0: #{rnn_forward.1}
  #allocation0 [shape = 'u32[]', space=smem, size = 0x4, offset = 0x4, fixed_abs, tag = 'smem constant byte address 0x4 - core index']
  #allocation1 [shape = 'u32[72,128]{1,0:T(1,128)}', space=vmem, size = 0x9000, scoped, tag = 'internal scratch']
  %s0 = inlined_call_operand.vmem [shape: bf16[48,4], index: 0, kind: input, shape index: {}]
  %s1 = inlined_call_operand.vmem [shape: bf16[544,64], index: 1, kind: input, shape index: {}]
  %s2 = inlined_call_operand.vmem [shape: f32[3,64], index: 2, kind: input, shape index: {}]
  %s3 = inlined_call_operand.hbm [shape: f32[2,3], index: 3, kind: output, shape index: {}]
  %s4 = sld [smem:[#allocation0]]
  $region22: #{rnn_forward.1} parent=0
    _
  %s6 = ssub.s32 1, %s4
  %s7 = scalar_select 0, %s6, %s4
  $region1: #{rnn_forward.1} parent=0
    #allocation2 [shape = 'u8[1024]{0}', space=vmem, size = 0x400, scoped, tag = 'output window, operand 0, single buffered']
    #allocation3 [shape = 's32[1]{0}', space=sflag, size = 0x4, scoped, tag = 'scoped memory for rnn_forward.1']
    %8 = vsyncpa [#allocation3], 0
    // Predicated region
    $region2: #{rnn_forward.1} parent=1 // pred_check
      _
    $region3: #{rnn_forward.1} parent=1 // pred_check_branch
      %10 = sbr.rel (0) target = $region5
    $region4: #{rnn_forward.1} parent=1 // pred_region
      _
    $region5: #{rnn_forward.1} parent=1 // pred_fallthru
      _
    // Predicated region
    $region6: #{rnn_forward.1} parent=1 // pred_check
      _
    $region7: #{rnn_forward.1} parent=1 // pred_check_branch
      %12 = sbr.rel (0) target = $region9
    $region8: #{rnn_forward.1} parent=1 // pred_region
      _
    $region9: #{rnn_forward.1} parent=1 // pred_fallthru
      _
    // Predicated region
    $region10: #{rnn_forward.1} parent=1 // pred_check
      _
    $region11: #{rnn_forward.1} parent=1 // pred_check_branch
      %14 = sbr.rel (0) target = $region13
    $region12: #{rnn_forward.1} parent=1 // pred_region
      _
    $region13: #{rnn_forward.1} parent=1 // pred_fallthru
      _
    %v16 = vld [vmem:[%s0] sm:$0xf]
    %v17 = vld [vmem:[%s0 + $0x4] sm:$0xf]
    %v18 = vld [vmem:[%s0 + $0x8] sm:$0xf]
    %v19 = vld [vmem:[%s0 + $0xc] sm:$0xf]
    %v20 = vld [vmem:[%s0 + $0x10] sm:$0xf]
    %v21 = vld [vmem:[%s0 + $0x14] sm:$0xf]
    %v22 = vld [vmem:[%s1] sm:$0x3]
    %v29 = vunpack.c.l.b16 %v16
    %v30 = vunpack.c.l.b16 %v17
    %v31 = vunpack.c.l.b16 %v18
    %v32 = vunpack.c.l.b16 %v19
    %v33 = vunpack.c.l.b16 %v20
    %v34 = vunpack.c.l.b16 %v21
    %v35 = vpack.c.b16 %v30, %v29
    %v36 = vpack.c.b16 %v32, %v31
    %v37 = vpack.c.b16 %v34, %v33
    %vm38 = vcmask 31744
    %v40 = vsel %vm38, %v35, 0
    %v43 = vsel %vm38, %v36, 0
    %v46 = vsel %vm38, %v37, 0
    %vm48 = vcmask 1041408
    %v50 = vsel %vm48, %v22, 0
    %52 = vmatpush.bf16.msra.mxu0 0
    %53 = vmatpush.bf16.msra.mxu0 0
    %54 = vmatpush.bf16.msra.mxu0 0
    %55 = vmatpush.bf16.msra.mxu0 0
    %56 = vmatpush.bf16.msra.mxu0 0
    %57 = vmatpush.bf16.msra.mxu0 0
    %58 = vmatpush.bf16.msra.mxu0 0
    %59 = vmatpush.bf16.msra.mxu0 %v50
    %60 = vmatmul.bf16.gmra.mxu0 %v40
    %v61 = vpop.f32.mrf.mxu0
    %v62 = vadd.f32 0.0, %v61
    %v63 = vpop.f32.mrf.mxu0
    %v64 = vadd.f32 0.0, %v63
    %65 = vmatmul.bf16.gmra.mxu0 %v43
    %v66 = vpop.f32.mrf.mxu0
    %v67 = vadd.f32 0.0, %v66
    %v68 = vpop.f32.mrf.mxu0
    %v69 = vadd.f32 0.0, %v68
    %70 = vmatmul.bf16.gmra.mxu0 %v46
    %v71 = vpop.f32.mrf.mxu0
    %v72 = vadd.f32 0.0, %v71
    %v73 = vpop.f32.mrf.mxu0
    %v74 = vadd.f32 0.0, %v73
    %75 = vdwg.mxu0
    %v76 = vmax.f32 %v62, 0.0
    %v77 = vmax.f32 %v64, 0.0
    %v78 = vmax.f32 %v67, 0.0
    %v79 = vmax.f32 %v69, 0.0
    %v80 = vmax.f32 %v72, 0.0
    %v81 = vmax.f32 %v74, 0.0
    %v82 = vpack.c.bf16 %v77, %v76
    %v83 = vpack.c.bf16 %v80, %v79
    %v84 = vld [vmem:[%s1 + $0x8] sm:$0xf]
    %v85 = vld [vmem:[%s1 + $0xc] sm:$0xf]
    %vm92 = vcmask 1046528
    %v93 = vrot.slane %v76, 1
    %v94 = vrot.slane %v77, 1
    %v95 = vsel %vm92, %v93, %v94
    %v96 = vrot.slane %v78, 1
    %v97 = vsel %vm92, %v94, %v96
    %v98 = vrot.slane %v79, 1
    %v99 = vrot.slane %v80, 1
    %v100 = vsel %vm92, %v98, %v99
    %v101 = vrot.slane %v81, 1
    %v102 = vsel %vm92, %v99, %v101
    %v107 = vpack.c.bf16 %v97, %v95
    %v108 = vpack.c.bf16 %v102, %v100
    %v109 = vld [vmem:[%s1 + $0x10] sm:$0xf]
    %v110 = vld [vmem:[%s1 + $0x14] sm:$0xf]
    %v113 = vunpack.c.l.b16 %v109
    %v114 = vunpack.c.l.b16 %v110
    %v115 = vpack.c.b16 %v114, %v113
    %vm117 = vcmask 130048
    %v119 = vsel %vm117, %v107, 0
    %v122 = vsel %vm117, %v108, 0
    %124 = vmatpush.bf16.msra.mxu0 0
    %125 = vmatpush.bf16.msra.mxu0 0
    %126 = vmatpush.bf16.msra.mxu0 0
    %127 = vmatpush.bf16.msra.mxu0 0
    %128 = vmatpush.bf16.msra.mxu0 0
    %129 = vmatpush.bf16.msra.mxu0 0
    %130 = vmatpush.bf16.msra.mxu0 0
    %131 = vmatpush.bf16.msra.mxu0 %v115
    %132 = vmatmul.bf16.gmra.mxu0 %v119
    %v133 = vpop.f32.mrf.mxu0
    %v134 = vadd.f32 0.0, %v133
    %v135 = vpop.f32.mrf.mxu0
    %v136 = vadd.f32 0.0, %v135
    %137 = vmatmul.bf16.gmra.mxu0 %v122
    %v138 = vpop.f32.mrf.mxu0
    %v139 = vadd.f32 0.0, %v138
    %v140 = vpop.f32.mrf.mxu0
    %v141 = vadd.f32 0.0, %v140
    %142 = vdwg.mxu0
    %v145 = vunpack.c.l.b16 %v84
    %v146 = vunpack.c.l.b16 %v85
    %v147 = vpack.c.b16 %v146, %v145
    %v150 = vsel %vm117, %v82, 0
    %v153 = vsel %vm117, %v83, 0
    %155 = vmatpush.bf16.msra.mxu0 0
    %156 = vmatpush.bf16.msra.mxu0 0
    %157 = vmatpush.bf16.msra.mxu0 0
    %158 = vmatpush.bf16.msra.mxu0 0
    %159 = vmatpush.bf16.msra.mxu0 0
    %160 = vmatpush.bf16.msra.mxu0 0
    %161 = vmatpush.bf16.msra.mxu0 0
    %162 = vmatpush.bf16.msra.mxu0 %v147
    %163 = vmatmul.bf16.gmra.mxu0 %v150
    %v164 = vpop.f32.mrf.mxu0
    %v165 = vadd.f32 %v134, %v164
    %v166 = vpop.f32.mrf.mxu0
    %v167 = vadd.f32 %v136, %v166
    %168 = vmatmul.bf16.gmra.mxu0 %v153
    %v169 = vpop.f32.mrf.mxu0
    %v170 = vadd.f32 %v139, %v169
    %v171 = vpop.f32.mrf.mxu0
    %v172 = vadd.f32 %v141, %v171
    %173 = vdwg.mxu0
    %vm174 = vcmask 1045504
    %v175 = vrot.slane %v76, 2
    %v176 = vrot.slane %v77, 2
    %v177 = vsel %vm174, %v175, %v176
    %v178 = vrot.slane %v78, 2
    %v179 = vsel %vm174, %v176, %v178
    %v180 = vrot.slane %v79, 2
    %v181 = vrot.slane %v80, 2
    %v182 = vsel %vm174, %v180, %v181
    %v183 = vrot.slane %v81, 2
    %v184 = vsel %vm174, %v181, %v183
    %v189 = vpack.c.bf16 %v179, %v177
    %v190 = vpack.c.bf16 %v184, %v182
    %v191 = vld [vmem:[%s1 + $0x18] sm:$0xf]
    %v192 = vld [vmem:[%s1 + $0x1c] sm:$0xf]
    %v195 = vunpack.c.l.b16 %v191
    %v196 = vunpack.c.l.b16 %v192
    %v197 = vpack.c.b16 %v196, %v195
    %v200 = vsel %vm117, %v189, 0
    %v203 = vsel %vm117, %v190, 0
    %205 = vmatpush.bf16.msra.mxu0 0
    %206 = vmatpush.bf16.msra.mxu0 0
    %207 = vmatpush.bf16.msra.mxu0 0
    %208 = vmatpush.bf16.msra.mxu0 0
    %209 = vmatpush.bf16.msra.mxu0 0
    %210 = vmatpush.bf16.msra.mxu0 0
    %211 = vmatpush.bf16.msra.mxu0 0
    %212 = vmatpush.bf16.msra.mxu0 %v197
    %213 = vmatmul.bf16.gmra.mxu0 %v200
    %v214 = vpop.f32.mrf.mxu0
    %v215 = vadd.f32 0.0, %v214
    %v216 = vpop.f32.mrf.mxu0
    %v217 = vadd.f32 0.0, %v216
    %218 = vmatmul.bf16.gmra.mxu0 %v203
    %v219 = vpop.f32.mrf.mxu0
    %v220 = vadd.f32 0.0, %v219
    %v221 = vpop.f32.mrf.mxu0
    %v222 = vadd.f32 0.0, %v221
    %223 = vdwg.mxu0
    %v224 = vadd.f32 %v165, %v215
    %v225 = vadd.f32 %v167, %v217
    %v226 = vadd.f32 %v170, %v220
    %v227 = vadd.f32 %v172, %v222
    %v228 = vld [vmem:[%s2] sm:$0x1]
    %v229 = vperm.slane %v228, 0
    %v230 = vadd.f32 %v224, %v229
    %v231 = vadd.f32 %v225, %v229
    %v232 = vadd.f32 %v226, %v229
    %v233 = vadd.f32 %v227, %v229
    %v234 = vmax.f32 %v230, 0.0
    %v235 = vmax.f32 %v231, 0.0
    %v236 = vmax.f32 %v232, 0.0
    %v237 = vmax.f32 %v233, 0.0
    %v238 = vpack.c.bf16 %v234, %v234
    %v239 = vpack.c.bf16 %v236, %v236
    %v240 = vld [vmem:[%s1 + $0x20] sm:$0xf]
    %v241 = vld [vmem:[%s1 + $0x24] sm:$0xf]
    %v242 = vld [vmem:[%s1 + $0x28] sm:$0xf]
    %v243 = vld [vmem:[%s1 + $0x2c] sm:$0xf]
    %v244 = vld [vmem:[%s1 + $0x30] sm:$0xf]
    %v245 = vld [vmem:[%s1 + $0x34] sm:$0xf]
    %v246 = vld [vmem:[%s1 + $0x38] sm:$0xf]
    %v247 = vld [vmem:[%s1 + $0x3c] sm:$0xf]
    %v250 = vrot.slane %v238, 2
    %v251 = vrot.slane %v239, 2
    %v254 = vsel %vm48, %v238, %v250
    %vm256 = vcmask 1043458
    %v257 = vsel %vm256, %v238, %v250
    %v259 = vrot.slane %v257, 2
    %v262 = vsel %vm48, %v239, %v251
    %v264 = vsel %vm256, %v239, %v251
    %v266 = vrot.slane %v264, 2
    %vm267 = vcmask 1040384
    %vm268 = vcmask 1042434
    %vm269 = vmor %vm267, %vm268
    %vm270 = vcmask 1044484
    %vm271 = vmor %vm269, %vm270
    %vm272 = vcmask 1046534
    %vm273 = vmor %vm271, %vm272
    %v274 = vrot.slane %v254, 7
    %v275 = vrot.slane %v274, 2
    %v276 = vrot.slane %v259, 7
    %v277 = vsel %vm273, %v275, %v276
    %v278 = vrot.slane %v262, 7
    %v279 = vrot.slane %v278, 2
    %v280 = vrot.slane %v266, 7
    %v281 = vsel %vm273, %v279, %v280
    %283 = vst [vmem:[#allocation1] ss:$4 sm:$0xff] %v277
    %s285 = scalar_lea.vmem [#allocation1], 1
    %286 = vst [vmem:[%s285] ss:$4 sm:$0xff] %v281
    %v287 = vld.sshfl [vmem:[#allocation1] sm:$0xff pattern:$0x73625140]
    %v292 = vunpack.c.l.b16 %v244
    %v293 = vunpack.c.l.b16 %v245
    %v294 = vunpack.c.l.b16 %v246
    %v295 = vunpack.c.l.b16 %v247
    %v296 = vpack.c.b16 %v293, %v292
    %v297 = vpack.c.b16 %v295, %v294
    %vm300 = vcmask 261120
    %v301 = vsel %vm300, %v287, 0
    %303 = vmatpush.bf16.msra.mxu0 0
    %304 = vmatpush.bf16.msra.mxu0 0
    %305 = vmatpush.bf16.msra.mxu0 0
    %306 = vmatpush.bf16.msra.mxu0 0
    %307 = vmatpush.bf16.msra.mxu0 0
    %308 = vmatpush.bf16.msra.mxu0 0
    %309 = vmatpush.bf16.msra.mxu0 %v297
    %310 = vmatpush.bf16.msra.mxu0 %v296
    %311 = vmatmul.bf16.gmra.mxu0 %v301
    %v312 = vpop.f32.mrf.mxu0
    %v313 = vadd.f32 0.0, %v312
    %v314 = vpop.f32.mrf.mxu0
    %315 = vdwg.mxu0
    %316 = vst [vmem:[#allocation1] ss:$4 sm:$0xff] %v238
    %s317 = scalar_lea.vmem [#allocation1], 1
    %318 = vst [vmem:[%s317] ss:$4 sm:$0xff] %v239
    %v319 = vld.sshfl [vmem:[#allocation1] sm:$0xff pattern:$0x73625140]
    %v324 = vunpack.c.l.b16 %v240
    %v325 = vunpack.c.l.b16 %v241
    %v326 = vunpack.c.l.b16 %v242
    %v327 = vunpack.c.l.b16 %v243
    %v328 = vpack.c.b16 %v325, %v324
    %v329 = vpack.c.b16 %v327, %v326
    %v332 = vsel %vm300, %v319, 0
    %334 = vmatpush.bf16.msra.mxu0 0
    %335 = vmatpush.bf16.msra.mxu0 0
    %336 = vmatpush.bf16.msra.mxu0 0
    %337 = vmatpush.bf16.msra.mxu0 0
    %338 = vmatpush.bf16.msra.mxu0 0
    %339 = vmatpush.bf16.msra.mxu0 0
    %340 = vmatpush.bf16.msra.mxu0 %v329
    %341 = vmatpush.bf16.msra.mxu0 %v328
    %342 = vmatmul.bf16.gmra.mxu0 %v332
    %v343 = vpop.f32.mrf.mxu0
    %v344 = vadd.f32 %v313, %v343
    %v345 = vpop.f32.mrf.mxu0
    %346 = vdwg.mxu0
    %v348 = vrot.slane %v344, 4
    %v350 = vld [vmem:[%s1 + $0x40] sm:$0xf]
    %v351 = vld [vmem:[%s1 + $0x44] sm:$0xf]
    %v352 = vld [vmem:[%s1 + $0x48] sm:$0xf]
    %v353 = vld [vmem:[%s1 + $0x4c] sm:$0xf]
    %354 = vst.sshfl [vmem:[#allocation1] sm:$0xff pattern:$0x75643120] %v238
    %s355 = scalar_lea.vmem [#allocation1], 1
    %v356 = vld [vmem:[%s355] ss:$2 sm:$0xff]
    %357 = vst.sshfl [vmem:[#allocation1 + $0x10] sm:$0xff pattern:$0x75643120] %v239
    %s358 = scalar_lea.vmem [#allocation1], 17
    %v359 = vld [vmem:[%s358] ss:$2 sm:$0xff]
    %360 = vst [vmem:[#allocation1] ss:$4 sm:$0xff] %v356
    %s361 = scalar_lea.vmem [#allocation1], 1
    %362 = vst [vmem:[%s361] ss:$4 sm:$0xff] %v359
    %v363 = vld.sshfl [vmem:[#allocation1] sm:$0xff pattern:$0x73625140]
    %v368 = vunpack.c.l.b16 %v350
    %v369 = vunpack.c.l.b16 %v351
    %v370 = vunpack.c.l.b16 %v352
    %v371 = vunpack.c.l.b16 %v353
    %v372 = vpack.c.b16 %v369, %v368
    %v373 = vpack.c.b16 %v371, %v370
    %v376 = vsel %vm300, %v363, 0
    %378 = vmatpush.bf16.msra.mxu0 0
    %379 = vmatpush.bf16.msra.mxu0 0
    %380 = vmatpush.bf16.msra.mxu0 0
    %381 = vmatpush.bf16.msra.mxu0 0
    %382 = vmatpush.bf16.msra.mxu0 0
    %383 = vmatpush.bf16.msra.mxu0 0
    %384 = vmatpush.bf16.msra.mxu0 %v373
    %385 = vmatpush.bf16.msra.mxu0 %v372
    %386 = vmatmul.bf16.gmra.mxu0 %v376
    %v387 = vpop.f32.mrf.mxu0
    %v388 = vadd.f32 0.0, %v387
    %v389 = vpop.f32.mrf.mxu0
    %390 = vdwg.mxu0
    %v392 = vrot.slane %v388, 4
    %v394 = vadd.f32 %v344, %v388
    %v395 = vadd.f32 %v348, %v392
    %v396 = vpack.c.bf16 %v235, %v235
    %v397 = vpack.c.bf16 %v237, %v237
    %v398 = vld [vmem:[%s1 + $0x50] sm:$0xf]
    %v399 = vld [vmem:[%s1 + $0x54] sm:$0xf]
    %v400 = vld [vmem:[%s1 + $0x58] sm:$0xf]
    %v401 = vld [vmem:[%s1 + $0x5c] sm:$0xf]
    %402 = vst.sshfl [vmem:[#allocation1] sm:$0xff pattern:$0x75643120] %v238
    %404 = vst.sshfl [vmem:[#allocation1 + $0x10] sm:$0xff pattern:$0x75643120] %v396
    %s405 = scalar_lea.vmem [#allocation1], 1
    %v406 = vld [vmem:[%s405] ss:$2 sm:$0xff]
    %s408 = scalar_lea.vmem [#allocation1], 16
    %v409 = vld [vmem:[%s408] ss:$2 sm:$0xff]
    %411 = vst.sshfl [vmem:[#allocation1 + $0x20] sm:$0xff pattern:$0x75643120] %v239
    %413 = vst.sshfl [vmem:[#allocation1 + $0x30] sm:$0xff pattern:$0x75643120] %v397
    %s414 = scalar_lea.vmem [#allocation1], 33
    %v415 = vld [vmem:[%s414] ss:$2 sm:$0xff]
    %s417 = scalar_lea.vmem [#allocation1], 48
    %v418 = vld [vmem:[%s417] ss:$2 sm:$0xff]
    %v420 = vrot.slane %v406, 7
    %v421 = vrot.slane %v420, 2
    %v422 = vrot.slane %v409, 7
    %v423 = vsel %vm273, %v421, %v422
    %v424 = vrot.slane %v415, 7
    %v425 = vrot.slane %v424, 2
    %v426 = vrot.slane %v418, 7
    %v427 = vsel %vm273, %v425, %v426
    %429 = vst [vmem:[#allocation1] ss:$4 sm:$0xff] %v423
    %s431 = scalar_lea.vmem [#allocation1], 1
    %432 = vst [vmem:[%s431] ss:$4 sm:$0xff] %v427
    %v433 = vld.sshfl [vmem:[#allocation1] sm:$0xff pattern:$0x73625140]
    %v438 = vunpack.c.l.b16 %v398
    %v439 = vunpack.c.l.b16 %v399
    %v440 = vunpack.c.l.b16 %v400
    %v441 = vunpack.c.l.b16 %v401
    %v442 = vpack.c.b16 %v439, %v438
    %v443 = vpack.c.b16 %v441, %v440
    %v446 = vsel %vm300, %v433, 0
    %448 = vmatpush.bf16.msra.mxu0 0
    %449 = vmatpush.bf16.msra.mxu0 0
    %450 = vmatpush.bf16.msra.mxu0 0
    %451 = vmatpush.bf16.msra.mxu0 0
    %452 = vmatpush.bf16.msra.mxu0 0
    %453 = vmatpush.bf16.msra.mxu0 0
    %454 = vmatpush.bf16.msra.mxu0 %v443
    %455 = vmatpush.bf16.msra.mxu0 %v442
    %456 = vmatmul.bf16.gmra.mxu0 %v446
    %v457 = vpop.f32.mrf.mxu0
    %v458 = vadd.f32 0.0, %v457
    %v459 = vpop.f32.mrf.mxu0
    %460 = vdwg.mxu0
    %v462 = vrot.slane %v458, 4
    %v464 = vadd.f32 %v394, %v458
    %v465 = vadd.f32 %v395, %v462
    %v466 = vld [vmem:[%s1 + $0x60] sm:$0xf]
    %v467 = vld [vmem:[%s1 + $0x64] sm:$0xf]
    %v468 = vld [vmem:[%s1 + $0x68] sm:$0xf]
    %v469 = vld [vmem:[%s1 + $0x6c] sm:$0xf]
    %470 = vst [vmem:[#allocation1] ss:$4 sm:$0xff] %v396
    %s471 = scalar_lea.vmem [#allocation1], 1
    %472 = vst [vmem:[%s471] ss:$4 sm:$0xff] %v397
    %v473 = vld.sshfl [vmem:[#allocation1] sm:$0xff pattern:$0x73625140]
    %v478 = vunpack.c.l.b16 %v466
    %v479 = vunpack.c.l.b16 %v467
    %v480 = vunpack.c.l.b16 %v468
    %v481 = vunpack.c.l.b16 %v469
    %v482 = vpack.c.b16 %v479, %v478
    %v483 = vpack.c.b16 %v481, %v480
    %v486 = vsel %vm300, %v473, 0
    %488 = vmatpush.bf16.msra.mxu0 0
    %489 = vmatpush.bf16.msra.mxu0 0
    %490 = vmatpush.bf16.msra.mxu0 0
    %491 = vmatpush.bf16.msra.mxu0 0
    %492 = vmatpush.bf16.msra.mxu0 0
    %493 = vmatpush.bf16.msra.mxu0 0
    %494 = vmatpush.bf16.msra.mxu0 %v483
    %495 = vmatpush.bf16.msra.mxu0 %v482
    %496 = vmatmul.bf16.gmra.mxu0 %v486
    %v497 = vpop.f32.mrf.mxu0
    %v498 = vadd.f32 0.0, %v497
    %v499 = vpop.f32.mrf.mxu0
    %500 = vdwg.mxu0
    %v502 = vrot.slane %v498, 4
    %v504 = vadd.f32 %v464, %v498
    %v505 = vadd.f32 %v465, %v502
    %v506 = vld [vmem:[%s1 + $0x70] sm:$0xf]
    %v507 = vld [vmem:[%s1 + $0x74] sm:$0xf]
    %v508 = vld [vmem:[%s1 + $0x78] sm:$0xf]
    %v509 = vld [vmem:[%s1 + $0x7c] sm:$0xf]
    %v512 = vrot.slane %v396, 2
    %v513 = vrot.slane %v397, 2
    %v515 = vsel %vm48, %v396, %v512
    %v517 = vsel %vm256, %v396, %v512
    %v519 = vrot.slane %v517, 2
    %v521 = vsel %vm48, %v397, %v513
    %v523 = vsel %vm256, %v397, %v513
    %v525 = vrot.slane %v523, 2
    %v526 = vrot.slane %v515, 7
    %v527 = vrot.slane %v526, 2
    %v528 = vrot.slane %v519, 7
    %v529 = vsel %vm273, %v527, %v528
    %v530 = vrot.slane %v521, 7
    %v531 = vrot.slane %v530, 2
    %v532 = vrot.slane %v525, 7
    %v533 = vsel %vm273, %v531, %v532
    %535 = vst [vmem:[#allocation1] ss:$4 sm:$0xff] %v529
    %s537 = scalar_lea.vmem [#allocation1], 1
    %538 = vst [vmem:[%s537] ss:$4 sm:$0xff] %v533
    %v539 = vld.sshfl [vmem:[#allocation1] sm:$0xff pattern:$0x73625140]
    %v544 = vunpack.c.l.b16 %v506
    %v545 = vunpack.c.l.b16 %v507
    %v546 = vunpack.c.l.b16 %v508
    %v547 = vunpack.c.l.b16 %v509
    %v548 = vpack.c.b16 %v545, %v544
    %v549 = vpack.c.b16 %v547, %v546
    %v552 = vsel %vm300, %v539, 0
    %554 = vmatpush.bf16.msra.mxu0 0
    %555 = vmatpush.bf16.msra.mxu0 0
    %556 = vmatpush.bf16.msra.mxu0 0
    %557 = vmatpush.bf16.msra.mxu0 0
    %558 = vmatpush.bf16.msra.mxu0 0
    %559 = vmatpush.bf16.msra.mxu0 0
    %560 = vmatpush.bf16.msra.mxu0 %v549
    %561 = vmatpush.bf16.msra.mxu0 %v548
    %562 = vmatmul.bf16.gmra.mxu0 %v552
    %v563 = vpop.f32.mrf.mxu0
    %v564 = vadd.f32 0.0, %v563
    %v565 = vpop.f32.mrf.mxu0
    %566 = vdwg.mxu0
    %v568 = vrot.slane %v564, 4
    %v570 = vadd.f32 %v504, %v564
    %v571 = vadd.f32 %v505, %v568
    %v572 = vld [vmem:[%s1 + $0x80] sm:$0xf]
    %v573 = vld [vmem:[%s1 + $0x84] sm:$0xf]
    %v574 = vld [vmem:[%s1 + $0x88] sm:$0xf]
    %v575 = vld [vmem:[%s1 + $0x8c] sm:$0xf]
    %576 = vst.sshfl [vmem:[#allocation1] sm:$0xff pattern:$0x75643120] %v396
    %s577 = scalar_lea.vmem [#allocation1], 1
    %v578 = vld [vmem:[%s577] ss:$2 sm:$0xff]
    %579 = vst.sshfl [vmem:[#allocation1 + $0x10] sm:$0xff pattern:$0x75643120] %v397
    %s580 = scalar_lea.vmem [#allocation1], 17
    %v581 = vld [vmem:[%s580] ss:$2 sm:$0xff]
    %582 = vst [vmem:[#allocation1] ss:$4 sm:$0xff] %v578
    %s583 = scalar_lea.vmem [#allocation1], 1
    %584 = vst [vmem:[%s583] ss:$4 sm:$0xff] %v581
    %v585 = vld.sshfl [vmem:[#allocation1] sm:$0xff pattern:$0x73625140]
    %v590 = vunpack.c.l.b16 %v572
    %v591 = vunpack.c.l.b16 %v573
    %v592 = vunpack.c.l.b16 %v574
    %v593 = vunpack.c.l.b16 %v575
    %v594 = vpack.c.b16 %v591, %v590
    %v595 = vpack.c.b16 %v593, %v592
    %v598 = vsel %vm300, %v585, 0
    %600 = vmatpush.bf16.msra.mxu0 0
    %601 = vmatpush.bf16.msra.mxu0 0
    %602 = vmatpush.bf16.msra.mxu0 0
    %603 = vmatpush.bf16.msra.mxu0 0
    %604 = vmatpush.bf16.msra.mxu0 0
    %605 = vmatpush.bf16.msra.mxu0 0
    %606 = vmatpush.bf16.msra.mxu0 %v595
    %607 = vmatpush.bf16.msra.mxu0 %v594
    %608 = vmatmul.bf16.gmra.mxu0 %v598
    %v609 = vpop.f32.mrf.mxu0
    %v610 = vadd.f32 0.0, %v609
    %v611 = vpop.f32.mrf.mxu0
    %612 = vdwg.mxu0
    %v614 = vrot.slane %v610, 4
    %v616 = vadd.f32 %v570, %v610
    %v617 = vadd.f32 %v571, %v614
    %v618 = vld [vmem:[%s2 + $0x1] sm:$0x1]
    %v619 = vperm.slane %v618, 0
    %v620 = vadd.f32 %v616, %v619
    %v621 = vadd.f32 %v617, %v619
    %v622 = vmax.f32 %v620, 0.0
    %v623 = vmax.f32 %v621, 0.0
    %v624 = vpack.c.bf16 %v622, %v622
    %v625 = vpack.c.bf16 %v623, %v623
    %v626 = vld [vmem:[%s1 + $0x90] sm:$0xf]
    %v627 = vld [vmem:[%s1 + $0x94] sm:$0xf]
    %v628 = vld [vmem:[%s1 + $0x98] sm:$0xf]
    %v629 = vld [vmem:[%s1 + $0x9c] sm:$0xf]
    %v630 = vld [vmem:[%s1 + $0xa0] sm:$0xf]
    %v631 = vld [vmem:[%s1 + $0xa4] sm:$0xf]
    %v632 = vld [vmem:[%s1 + $0xa8] sm:$0xf]
    %v633 = vld [vmem:[%s1 + $0xac] sm:$0xf]
    %v634 = vld [vmem:[%s1 + $0xb0] sm:$0xf]
    %v635 = vld [vmem:[%s1 + $0xb4] sm:$0xf]
    %v636 = vld [vmem:[%s1 + $0xb8] sm:$0xf]
    %v637 = vld [vmem:[%s1 + $0xbc] sm:$0xf]
    %v638 = vld [vmem:[%s1 + $0xc0] sm:$0xf]
    %v639 = vld [vmem:[%s1 + $0xc4] sm:$0xf]
    %v640 = vld [vmem:[%s1 + $0xc8] sm:$0xf]
    %v641 = vld [vmem:[%s1 + $0xcc] sm:$0xf]
    %v644 = vunpack.c.l.b16 %v624
    %v645 = vunpack.c.l.b16 %v625
    %v646 = vrot.slane %v644, 1
    %vm647 = vcmask 1041409
    %v648 = vsel %vm647, %v645, %v646
    %v649 = vpack.c.b16 %v648, %v648
    %v658 = vunpack.c.l.b16 %v634
    %v659 = vunpack.c.l.b16 %v635
    %v660 = vunpack.c.l.b16 %v636
    %v661 = vunpack.c.l.b16 %v637
    %v662 = vunpack.c.l.b16 %v638
    %v663 = vunpack.c.l.b16 %v639
    %v664 = vunpack.c.l.b16 %v640
    %v665 = vunpack.c.l.b16 %v641
    %v666 = vpack.c.b16 %v659, %v658
    %v667 = vpack.c.b16 %v661, %v660
    %v668 = vpack.c.b16 %v663, %v662
    %v669 = vpack.c.b16 %v665, %v664
    %vm674 = vcmask 523264
    %v676 = vsel %vm674, %v649, 0
    %678 = vmatpush.bf16.msra.mxu0 0
    %679 = vmatpush.bf16.msra.mxu0 0
    %680 = vmatpush.bf16.msra.mxu0 0
    %681 = vmatpush.bf16.msra.mxu0 0
    %682 = vmatpush.bf16.msra.mxu0 %v669
    %683 = vmatpush.bf16.msra.mxu0 %v668
    %684 = vmatpush.bf16.msra.mxu0 %v667
    %685 = vmatpush.bf16.msra.mxu0 %v666
    %686 = vmatmul.bf16.gmra.mxu0 %v676
    %v687 = vpop.f32.mrf.mxu0
    %v688 = vadd.f32 0.0, %v687
    %v689 = vpop.f32.mrf.mxu0
    %690 = vdwg.mxu0
    %v691 = vrot.slane %v645, 7
    %v692 = vsel %vm647, %v691, %v644
    %v693 = vpack.c.b16 %v692, %v692
    %v702 = vunpack.c.l.b16 %v626
    %v703 = vunpack.c.l.b16 %v627
    %v704 = vunpack.c.l.b16 %v628
    %v705 = vunpack.c.l.b16 %v629
    %v706 = vunpack.c.l.b16 %v630
    %v707 = vunpack.c.l.b16 %v631
    %v708 = vunpack.c.l.b16 %v632
    %v709 = vunpack.c.l.b16 %v633
    %v710 = vpack.c.b16 %v703, %v702
    %v711 = vpack.c.b16 %v705, %v704
    %v712 = vpack.c.b16 %v707, %v706
    %v713 = vpack.c.b16 %v709, %v708
    %v719 = vsel %vm674, %v693, 0
    %721 = vmatpush.bf16.msra.mxu0 0
    %722 = vmatpush.bf16.msra.mxu0 0
    %723 = vmatpush.bf16.msra.mxu0 0
    %724 = vmatpush.bf16.msra.mxu0 0
    %725 = vmatpush.bf16.msra.mxu0 %v713
    %726 = vmatpush.bf16.msra.mxu0 %v712
    %727 = vmatpush.bf16.msra.mxu0 %v711
    %728 = vmatpush.bf16.msra.mxu0 %v710
    %729 = vmatmul.bf16.gmra.mxu0 %v719
    %v730 = vpop.f32.mrf.mxu0
    %v731 = vadd.f32 %v688, %v730
    %v732 = vpop.f32.mrf.mxu0
    %733 = vdwg.mxu0
    %v734 = vld [vmem:[%s1 + $0xd0] sm:$0xf]
    %v735 = vld [vmem:[%s1 + $0xd4] sm:$0xf]
    %v736 = vld [vmem:[%s1 + $0xd8] sm:$0xf]
    %v737 = vld [vmem:[%s1 + $0xdc] sm:$0xf]
    %v738 = vld [vmem:[%s1 + $0xe0] sm:$0xf]
    %v739 = vld [vmem:[%s1 + $0xe4] sm:$0xf]
    %v740 = vld [vmem:[%s1 + $0xe8] sm:$0xf]
    %v741 = vld [vmem:[%s1 + $0xec] sm:$0xf]
    %v742 = vrot.slane %v644, 2
    %v743 = vrot.slane %v645, 1
    %v744 = vsel %vm647, %v743, %v742
    %v745 = vpack.c.b16 %v744, %v744
    %v754 = vunpack.c.l.b16 %v734
    %v755 = vunpack.c.l.b16 %v735
    %v756 = vunpack.c.l.b16 %v736
    %v757 = vunpack.c.l.b16 %v737
    %v758 = vunpack.c.l.b16 %v738
    %v759 = vunpack.c.l.b16 %v739
    %v760 = vunpack.c.l.b16 %v740
    %v761 = vunpack.c.l.b16 %v741
    %v762 = vpack.c.b16 %v755, %v754
    %v763 = vpack.c.b16 %v757, %v756
    %v764 = vpack.c.b16 %v759, %v758
    %v765 = vpack.c.b16 %v761, %v760
    %v771 = vsel %vm674, %v745, 0
    %773 = vmatpush.bf16.msra.mxu0 0
    %774 = vmatpush.bf16.msra.mxu0 0
    %775 = vmatpush.bf16.msra.mxu0 0
    %776 = vmatpush.bf16.msra.mxu0 0
    %777 = vmatpush.bf16.msra.mxu0 %v765
    %778 = vmatpush.bf16.msra.mxu0 %v764
    %779 = vmatpush.bf16.msra.mxu0 %v763
    %780 = vmatpush.bf16.msra.mxu0 %v762
    %781 = vmatmul.bf16.gmra.mxu0 %v771
    %v782 = vpop.f32.mrf.mxu0
    %v783 = vadd.f32 0.0, %v782
    %v784 = vpop.f32.mrf.mxu0
    %785 = vdwg.mxu0
    %v786 = vadd.f32 %v731, %v783
    %v787 = vld [vmem:[%s1 + $0xf0] sm:$0xf]
    %v788 = vld [vmem:[%s1 + $0xf4] sm:$0xf]
    %v789 = vld [vmem:[%s1 + $0xf8] sm:$0xf]
    %v790 = vld [vmem:[%s1 + $0xfc] sm:$0xf]
    %v791 = vld [vmem:[%s1 + $0x100] sm:$0xf]
    %v792 = vld [vmem:[%s1 + $0x104] sm:$0xf]
    %v793 = vld [vmem:[%s1 + $0x108] sm:$0xf]
    %v794 = vld [vmem:[%s1 + $0x10c] sm:$0xf]
    %v795 = vrot.slane %v644, 3
    %v796 = vrot.slane %v645, 2
    %v797 = vsel %vm647, %v796, %v795
    %v798 = vpack.c.b16 %v797, %v797
    %v807 = vunpack.c.l.b16 %v787
    %v808 = vunpack.c.l.b16 %v788
    %v809 = vunpack.c.l.b16 %v789
    %v810 = vunpack.c.l.b16 %v790
    %v811 = vunpack.c.l.b16 %v791
    %v812 = vunpack.c.l.b16 %v792
    %v813 = vunpack.c.l.b16 %v793
    %v814 = vunpack.c.l.b16 %v794
    %v815 = vpack.c.b16 %v808, %v807
    %v816 = vpack.c.b16 %v810, %v809
    %v817 = vpack.c.b16 %v812, %v811
    %v818 = vpack.c.b16 %v814, %v813
    %v824 = vsel %vm674, %v798, 0
    %826 = vmatpush.bf16.msra.mxu0 0
    %827 = vmatpush.bf16.msra.mxu0 0
    %828 = vmatpush.bf16.msra.mxu0 0
    %829 = vmatpush.bf16.msra.mxu0 0
    %830 = vmatpush.bf16.msra.mxu0 %v818
    %831 = vmatpush.bf16.msra.mxu0 %v817
    %832 = vmatpush.bf16.msra.mxu0 %v816
    %833 = vmatpush.bf16.msra.mxu0 %v815
    %834 = vmatmul.bf16.gmra.mxu0 %v824
    %v835 = vpop.f32.mrf.mxu0
    %v836 = vadd.f32 0.0, %v835
    %v837 = vpop.f32.mrf.mxu0
    %838 = vdwg.mxu0
    %v839 = vadd.f32 %v786, %v836
    %v840 = vld [vmem:[%s2 + $0x2] sm:$0x1]
    %v841 = vperm.slane %v840, 0
    %v842 = vadd.f32 %v839, %v841
    %vm843 = vcmask 17408
    %844 = vst.msk [vmem:[#allocation2] sm:$0x3] %vm843, %v842
    // Predicated region
    $region14: #{rnn_forward.1} parent=1 // pred_check
      _
    $region15: #{rnn_forward.1} parent=1 // pred_check_branch
      %846 = sbr.rel (0) target = $region17
    $region16: #{rnn_forward.1} parent=1 // pred_region
      %848 = vsyncadd [#allocation3], 0
      %s850 = sshll.u32 [#allocation2], 4
      %s851 = int_to_ptr.vmem [resolvable:$true] %s850
      %s852 = sshll.u32 %s3, 4
      %s853 = int_to_ptr.hbm [resolvable:$true] %s852
      %855 = dma.vmem_to_hbm [thread:$0]  %s851, 32, %s853, [#allocation3]
    $region17: #{rnn_forward.1} parent=1 // pred_fallthru
      _
    // Predicated region
    $region18: #{rnn_forward.1} parent=1 // pred_check
      _
    $region19: #{rnn_forward.1} parent=1 // pred_check_branch
      %857 = sbr.rel (0) target = $region21
    $region20: #{rnn_forward.1} parent=1 // pred_region
      %859 = dma.done [#allocation3], 32
    $region21: #{rnn_forward.1} parent=1 // pred_fallthru
      _
    %860 = vsyncpa [#allocation3], 1

</llo_original>
